<compile_context>
chip_gen: v6e
topology: v6e:2x2x1
jax: 0.10.0
libtpu: 0.0.40
codegen_flags: <defaults>
</compile_context>

<pallas_src>
import functools

import jax
import jax.numpy as jnp
from jax.experimental import pallas as pl
from jax.experimental.pallas import tpu as pltpu

_MIN = 0.01
_MAX = 1.0 - 0.01


def _clamped_sigmoid_kernel(x_ref, o_ref, *, compute_dtype):
    x = x_ref[...].astype(compute_dtype)        # no-op when dtypes already match
    # NOTE: pl.reciprocal(1 + exp(-x), approx=True) would push the divide onto
    # the EUP, but the kernel is HBM-bound and approx reciprocal costs a few
    # ULP, so we keep the exact sigmoid.
    y = jnp.clip(jax.nn.sigmoid(x), _MIN, _MAX)
    o_ref[...] = y.astype(o_ref.dtype)


def _device_kind():
    try:
        return jax.devices()[0].device_kind.lower()
    except Exception:
        return ""


def _vmem_limit_bytes():
    """~3/4 of physical VMEM (headroom for compiler scratch), capped at 96 MiB."""
    cap = None
    try:
        cap = int(pltpu.get_tpu_info().vmem_capacity_bytes)
    except Exception:
        cap = None
    if not cap:
        cap = (64 << 20) if "v7" in _device_kind() else (128 << 20)
    return min((cap * 3) // 4, 96 << 20)


def _compute_dtype(dtype):
    """f32 stays f32; bf16/f16 run natively on v6e/v7x, upcast to f32 elsewhere."""
    if dtype == jnp.float32:
        return jnp.float32
    kind = _device_kind()
    if ("v6" in kind) or ("v7" in kind):
        return dtype
    return jnp.float32            # v5e (or unknown): no bf16 VPU/EUP -> upcast


def _round_up(v, m):
    return ((v + m - 1) // m) * m


def _clamped_sigmoid_slab(flat, *, target_block_bytes):
    """Run the kernel on a 1-D array whose size is a multiple of 128."""
    n = flat.shape[0]
    dtype = flat.dtype

    # Widest lane dim in {1024, 512, 256, 128} that divides n -> unmasked vst.
    lane = 128
    for cand in (1024, 512, 256, 128):
        if n % cand == 0:
            lane = cand
            break
    rows = n // lane
    slab = flat.reshape(rows, lane)        # contiguous reshape: metadata only

    itemsize = jnp.dtype(dtype).itemsize
    sub = max(8, 32 // itemsize)           # sublane multiple: 8 f32, 16 bf16, 32 i8

    # Rows per block: ~target_block_bytes per buffer, rounded to the sublane
    # multiple, but never more than ~half the rows so the grid has >= 2 blocks
    # (keeps both v7x TensorCores busy).  Tiny inputs fall back to a single
    # full-extent block, which is always a legal block shape.
    max_rows = max(sub, (target_block_bytes // (lane * itemsize) // sub) * sub)
    if rows < 2 * sub:
        block_rows = rows
    else:
        block_rows = max(sub, min(max_rows, _round_up(pl.cdiv(rows, 2), sub)))
    grid = (pl.cdiv(rows, block_rows),)    # ragged last block is masked by Pallas

    kernel = functools.partial(
        _clamped_sigmoid_kernel, compute_dtype=_compute_dtype(dtype))

    out = pl.pallas_call(
        kernel,
        out_shape=jax.ShapeDtypeStruct((rows, lane), dtype),
        grid_spec=pltpu.PrefetchScalarGridSpec(
            num_scalar_prefetch=0,
            grid=grid,
            in_specs=[pl.BlockSpec((block_rows, lane), lambda i: (i, 0))],
            out_specs=pl.BlockSpec((block_rows, lane), lambda i: (i, 0)),
        ),
        compiler_params=pltpu.CompilerParams(
            dimension_semantics=("parallel",),
            vmem_limit_bytes=_vmem_limit_bytes(),
        ),
    )(slab)

    return out.reshape(-1)


def clamped_sigmoid(x, *, target_block_bytes=8 << 20):
    """Elementwise sigmoid + clamp to [0.01, 0.99] for any float array."""
    orig_shape = x.shape
    dtype = x.dtype
    n = x.size
    if n == 0:
        return x

    flat = x.reshape(-1)
    tail = n % 128
    n_main = n - tail

    parts = []
    if n_main:
        main = flat if tail == 0 else flat[:n_main]
        parts.append(
            _clamped_sigmoid_slab(main, target_block_bytes=target_block_bytes))
    if tail:
        # <128-element remainder: plain JAX (negligible work; avoids the
        # whole-array pad + slice passes of the previous revision).
        t = flat[n_main:]
        parts.append(
            jnp.clip(jax.nn.sigmoid(t.astype(jnp.float32)), _MIN, _MAX).astype(dtype))

    flat_out = parts[0] if len(parts) == 1 else jnp.concatenate(parts)
    return flat_out.reshape(orig_shape)


if __name__ == "__main__":
    key = jax.random.PRNGKey(0)
    x = jax.random.normal(key, (2, 4, 16, 16), dtype=jnp.float32) * 5.0

    y = clamped_sigmoid(x)
    jax.block_until_ready(y)

    # Reference check in plain JAX.
    ref = jnp.clip(jax.nn.sigmoid(x), _MIN, _MAX)
    assert y.shape == x.shape and y.dtype == x.dtype
    assert jnp.allclose(y, ref, atol=1e-6), float(jnp.max(jnp.abs(y - ref)))

    print("KERNEL_OK")
</pallas_src>

<mosaic_0001>
module attributes {stable_mosaic.version = 11 : i64} {
  func.func @_clamped_sigmoid_kernel(%arg0: i32, %arg1: memref<2x1024xf32, #tpu.memory_space<vmem>>, %arg2: memref<2x1024xf32, #tpu.memory_space<vmem>>) attributes {dimension_semantics = [#tpu.dimension_semantics<parallel>], iteration_bounds = array<i64: 1>, scalar_prefetch = 0 : i64, scratch_operands = 0 : i64, tpu.core_type = #tpu.core_type<tc>, window_params = [{transform_indices = @transform_0, window_bounds = array<i64: 2, 1024>}, {transform_indices = @transform_1, window_bounds = array<i64: 2, 1024>}]} {
    %c0 = arith.constant 0 : index
    %c0_0 = arith.constant 0 : index
    %0 = vector.load %arg1[%c0, %c0_0] : memref<2x1024xf32, #tpu.memory_space<vmem>>, vector<2x1024xf32>
    %1 = arith.negf %0 : vector<2x1024xf32>
    %2 = math.exp %1 : vector<2x1024xf32>
    %cst = arith.constant 1.000000e+00 : f32
    %3 = vector.broadcast %cst : f32 to vector<2x1024xf32>
    %4 = arith.addf %3, %2 : vector<2x1024xf32>
    %5 = arith.divf %3, %4 : vector<2x1024xf32>
    %cst_1 = arith.constant 0.00999999977 : f32
    %cst_2 = arith.constant 9.900000e-01 : f32
    %6 = vector.broadcast %cst_1 : f32 to vector<2x1024xf32>
    %7 = arith.maximumf %6, %5 : vector<2x1024xf32>
    %8 = vector.broadcast %cst_2 : f32 to vector<2x1024xf32>
    %9 = arith.minimumf %8, %7 : vector<2x1024xf32>
    %c0_3 = arith.constant 0 : index
    %c0_4 = arith.constant 0 : index
    %10 = vector.load %arg2[%c0_3, %c0_4] : memref<2x1024xf32, #tpu.memory_space<vmem>>, vector<2x1024xf32>
    tpu.vector_store %arg2[%c0_3, %c0_4], %9 {strides = array<i32>} : memref<2x1024xf32, #tpu.memory_space<vmem>>, vector<2x1024xf32>,
    return
  }
  func.func @transform_0(%arg0: i32) -> (i32, i32) {
    %c0_i32 = arith.constant 0 : i32
    %c0_i32_0 = arith.constant 0 : i32
    return %arg0, %c0_i32 : i32, i32
  }
  func.func @transform_1(%arg0: i32) -> (i32, i32) {
    %c0_i32 = arith.constant 0 : i32
    %c0_i32_0 = arith.constant 0 : i32
    return %arg0, %c0_i32 : i32, i32
  }
}

</mosaic_0001>

<llo_original>
// kernel: tpu_custom_call.1
$region0: #{tpu_custom_call.1}
  #allocation0 [shape = 'u32[]', space=smem, size = 0x4, offset = 0x4, fixed_abs, tag = 'smem constant byte address 0x4 - core index']
  #allocation1 [shape = 'u32[144,128]{1,0:T(1,128)}', space=vmem, size = 0x12000, scoped, tag = 'internal scratch']
  %s0 = inlined_call_operand.hbm [shape: f32[2,1024], index: 0, kind: input, shape index: {}]
  %s1 = inlined_call_operand.hbm [shape: f32[2,1024], index: 1, kind: output, shape index: {}]
  %s2 = sld [smem:[#allocation0]]
  $region18: #{tpu_custom_call.1} parent=0
    _
  %s4 = ssub.s32 1, %s2
  %s5 = scalar_select 0, %s4, %s2
  $region1: #{tpu_custom_call.1} parent=0
    #allocation2 [shape = 'u8[8192]{0}', space=vmem, size = 0x2000, scoped, tag = 'input window, operand 0, single buffered']
    #allocation3 [shape = 's32[1]{0}', space=sflag, size = 0x4, scoped, tag = 'scoped memory for tpu_custom_call.1']
    #allocation4 [shape = 's32[1]{0}', space=sflag, size = 0x4, scoped, tag = 'scoped memory for tpu_custom_call.1']
    #allocation5 [shape = 'u8[8192]{0}', space=vmem, size = 0x2000, scoped, tag = 'output window, operand 0, single buffered']
    %6 = vsyncpa [#allocation3], 0
    %7 = vsyncpa [#allocation4], 0
    // Predicated region
    $region2: #{tpu_custom_call.1} parent=1 // pred_check
      _
    $region3: #{tpu_custom_call.1} parent=1 // pred_check_branch
      %9 = sbr.rel (0) target = $region5
    $region4: #{tpu_custom_call.1} parent=1 // pred_region
      %s11 = ssub.s32 256, 256
      %12 = vsyncadd [#allocation3], %s11
      %s14 = sshll.u32 [#allocation2], 4
      %s15 = int_to_ptr.vmem [resolvable:$true] %s14
      %17 = dma.hbm_to_vmem [thread:$0]  %s0, 256, %s15, [#allocation3]
    $region5: #{tpu_custom_call.1} parent=1 // pred_fallthru
      _
    // Predicated region
    $region6: #{tpu_custom_call.1} parent=1 // pred_check
      _
    $region7: #{tpu_custom_call.1} parent=1 // pred_check_branch
      %19 = sbr.rel (0) target = $region9
    $region8: #{tpu_custom_call.1} parent=1 // pred_region
      %20 = dma.done [#allocation3], 256
    $region9: #{tpu_custom_call.1} parent=1 // pred_fallthru
      _
    %v21 = vld [vmem:[#allocation2] sm:$0xff]
    %v22 = vld [vmem:[#allocation2 + $0x8] sm:$0xff]
    %v23 = vxor.u32 %v21, 2147483648
    %v24 = vxor.u32 %v22, 2147483648
    %v25 = vmul.f32 %v23, 1.442695
    %v26 = vpow.pop %v25
    %v27 = vmul.f32 %v24, 1.442695
    %v28 = vpow.pop %v27
    %v29 = vadd.f32 %v26, 1.0
    %v30 = vadd.f32 %v28, 1.0
    %v31 = vrcp.pop %v29
    %v32 = vmul.f32 1.0, %v31
    %v33 = vrcp.pop %v30
    %v34 = vmul.f32 1.0, %v33
    %v35 = vmax.f32 %v32, 0.01
    %v36 = vmax.f32 %v34, 0.01
    %v37 = vmin.f32 %v35, 0.99
    %v38 = vmin.f32 %v36, 0.99
    %39 = vst [vmem:[#allocation5] sm:$0xff] %v37
    %40 = vst [vmem:[#allocation5 + $0x8] sm:$0xff] %v38
    // Predicated region
    $region10: #{tpu_custom_call.1} parent=1 // pred_check
      _
    $region11: #{tpu_custom_call.1} parent=1 // pred_check_branch
      %42 = sbr.rel (0) target = $region13
    $region12: #{tpu_custom_call.1} parent=1 // pred_region
      %s44 = ssub.s32 256, 256
      %45 = vsyncadd [#allocation4], %s44
      %s47 = sshll.u32 [#allocation5], 4
      %s48 = int_to_ptr.vmem [resolvable:$true] %s47
      %50 = dma.vmem_to_hbm [thread:$0]  %s48, 256, %s1, [#allocation4]
    $region13: #{tpu_custom_call.1} parent=1 // pred_fallthru
      _
    // Predicated region
    $region14: #{tpu_custom_call.1} parent=1 // pred_check
      _
    $region15: #{tpu_custom_call.1} parent=1 // pred_check_branch
      %52 = sbr.rel (0) target = $region17
    $region16: #{tpu_custom_call.1} parent=1 // pred_region
      %53 = dma.done [#allocation4], 256
    $region17: #{tpu_custom_call.1} parent=1 // pred_fallthru
      _
    %54 = vsyncpa [#allocation3], 1
    %55 = vsyncpa [#allocation4], 1

</llo_original>
